<compile_context>
chip_gen: v6e
topology: v6e:2x2x1
jax: 0.10.0
libtpu: 0.0.40
codegen_flags: <defaults>
</compile_context>

<pallas_src>
import functools

import jax
import jax.numpy as jnp
from jax.experimental import pallas as pl
from jax.experimental.pallas import tpu as pltpu


def _embeddings_kernel(p_ref, w_ref, scale_ref, shift_ref, o_ref, *,
                       tile_ph, oh, ow, pw, cout):
    # p_ref:     (1, 1, r_band*ow, kkc)  im2col patches for this (batch, row-tile)
    #            r_band = 2*tile_ph + 1 conv rows (incl. the 1-row pool halo)
    # w_ref:     (kkc, cout)             flattened conv weight (bf16)
    # scale_ref: (1, cout)               folded BatchNorm scale (f32)
    # shift_ref: (1, cout)               folded BatchNorm shift (f32)
    # o_ref:     (1, 1, tile_ph, pw*cout) pooled output rows, lane-dense
    r_band = 2 * tile_ph + 1
    ow_p = 2 * pw
    t = pl.program_id(1)

    # ---- conv as im2col matmul on the MXU (bf16 in, f32 acc) + BN + ReLU ----
    acc = jnp.dot(p_ref[0, 0], w_ref[...], preferred_element_type=jnp.float32)
    acc = jnp.maximum(acc * scale_ref[...] + shift_ref[...], 0.0)  # (r_band*ow, cout)
    act = acc.reshape(r_band, ow, cout)

    # Mask band rows that fall outside the valid conv-output range (the pool
    # padding rows).  Zero is a valid "-inf" here because values are post-ReLU.
    row0 = 2 * tile_ph * t - 1                      # global conv row of band row 0
    gidx = row0 + jax.lax.broadcasted_iota(jnp.int32, (r_band, 1, 1), 0)
    act = jnp.where((gidx >= 0) & (gidx < oh), act, 0.0)

    # ---- separable, vectorised MaxPool2d(kernel=3, stride=2, padding=1) ----
    # W direction: pooled col j = max(act[2j-1], act[2j], act[2j+1]).
    if ow_p > ow:  # right pool-padding column (only when ow is odd)
        act = jnp.concatenate(
            [act, jnp.zeros((r_band, ow_p - ow, cout), act.dtype)], axis=1)
    act_l = jnp.concatenate(
        [jnp.zeros((r_band, 1, cout), act.dtype), act[:, :ow_p - 1, :]], axis=1)
    b = jnp.maximum(act, act_l)                     # b[w] = max(act[w-1], act[w])
    pooled_w = jnp.max(b.reshape(r_band * pw, 2, cout), axis=1)
    pooled_w = pooled_w.reshape(r_band, pw, cout)   # (r_band, pw, cout)

    # H direction: pooled local row i = max over band rows 2i, 2i+1, 2i+2.
    c = jnp.maximum(pooled_w[:r_band - 1], pooled_w[1:])   # (2*tile_ph, pw, cout)
    c = c.reshape(2 * tile_ph, pw * cout)                   # lane-dense layout
    pooled = jnp.max(c.reshape(tile_ph, 2, pw * cout), axis=1)

    # Single unmasked, lane-dense store (last dim is a multiple of 128).
    o_ref[0, 0] = pooled


def resnet_embeddings(pixel_values, conv_weight, bn_gamma, bn_beta,
                      bn_mean, bn_var, *, stride=2, eps=1e-5, row_tile=None):
    """ResNetEmbeddings.forward (embedding_pooling_with_downsample=True).

    pixel_values: (N, Cin, H, W) float32, NCHW (PyTorch convention)
    conv_weight : (Cout, Cin, K, K)
    returns     : (N, Cout, PH, PW), NCHW, float32
    """
    n, cin, h, w_sp = pixel_values.shape
    cout, _, k, _ = conv_weight.shape
    pad = k // 2
    oh = (h + 2 * pad - k) // stride + 1
    ow = (w_sp + 2 * pad - k) // stride + 1
    # MaxPool2d(kernel=3, stride=2, padding=1) output size
    ph = (oh - 1) // 2 + 1
    pw = (ow - 1) // 2 + 1
    kkc = k * k * cin

    # --- choose pooled-row tile (largest divisor of ph <= row_tile) ---
    if row_tile is None:
        row_tile = 8
    tile_ph = 1
    for d in range(min(row_tile, ph), 0, -1):
        if ph % d == 0:
            tile_ph = d
            break
    n_tiles = ph // tile_ph
    r_band = 2 * tile_ph + 1   # conv rows needed per pooled-row tile (incl. halo)

    # --- glue: NCHW -> NHWC (bf16), spatial zero-pad, im2col ---
    x = jnp.transpose(pixel_values, (0, 2, 3, 1)).astype(jnp.bfloat16)
    x = jnp.pad(x, ((0, 0), (pad, pad), (pad, pad), (0, 0)))
    slabs = []
    for kh in range(k):
        for kw in range(k):
            slabs.append(x[:, kh:kh + stride * (oh - 1) + 1:stride,
                            kw:kw + stride * (ow - 1) + 1:stride, :])
    patches = jnp.concatenate(slabs, axis=-1)          # (N, OH, OW, K*K*Cin)

    # Extend conv rows by the pool halo: one row on top (conv row -1) and, when
    # OH is odd, one row at the bottom.  Halo rows are masked inside the kernel.
    patches_ext = jnp.pad(patches, ((0, 0), (1, 2 * ph - oh), (0, 0), (0, 0)))
    # Overlapping row bands, one per row tile (band t starts at conv row
    # 2*t*tile_ph - 1); duplicates 1 conv row per tile — negligible HBM cost.
    bands = [patches_ext[:, 2 * t * tile_ph: 2 * t * tile_ph + r_band]
             for t in range(n_tiles)]
    banded = jnp.stack(bands, axis=1)                  # (N, T, r_band, OW, kkc)
    banded = banded.reshape(n, n_tiles, r_band * ow, kkc)

    # Weight (Cout, Cin, K, K) -> (K, K, Cin, Cout) -> (kkc, Cout), matching the
    # (kh, kw, cin) ordering of the patches above; bf16 for the MXU.
    w_mat = jnp.transpose(conv_weight, (2, 3, 1, 0)).reshape(kkc, cout)
    w_mat = w_mat.astype(jnp.bfloat16)

    # Fold eval-mode BatchNorm into a per-channel affine (f32).
    inv_std = 1.0 / jnp.sqrt(bn_var.astype(jnp.float32) + eps)
    scale = (bn_gamma * inv_std).astype(jnp.float32).reshape(1, cout)
    shift = (bn_beta - bn_mean * bn_gamma * inv_std).astype(jnp.float32)
    shift = shift.reshape(1, cout)

    kernel = functools.partial(_embeddings_kernel, tile_ph=tile_ph,
                               oh=oh, ow=ow, pw=pw, cout=cout)
    out = pl.pallas_call(
        kernel,
        out_shape=jax.ShapeDtypeStruct((n, n_tiles, tile_ph, pw * cout),
                                       jnp.float32),
        grid_spec=pltpu.PrefetchScalarGridSpec(
            num_scalar_prefetch=0,
            grid=(n, n_tiles),
            in_specs=[
                pl.BlockSpec((1, 1, r_band * ow, kkc), lambda b, t: (b, t, 0, 0)),
                pl.BlockSpec((kkc, cout), lambda b, t: (0, 0)),
                pl.BlockSpec((1, cout), lambda b, t: (0, 0)),
                pl.BlockSpec((1, cout), lambda b, t: (0, 0)),
            ],
            out_specs=pl.BlockSpec((1, 1, tile_ph, pw * cout),
                                   lambda b, t: (b, t, 0, 0)),
        ),
        compiler_params=pltpu.CompilerParams(
            dimension_semantics=("parallel", "parallel"),
            vmem_limit_bytes=32 * 1024 * 1024),
    )(banded, w_mat, scale, shift)

    # (N, T, tile_ph, pw*cout) -> (N, PH, PW, Cout) -> NCHW
    out = out.reshape(n, ph, pw, cout)
    return jnp.transpose(out, (0, 3, 1, 2))


def _reference(pixel_values, conv_weight, gamma, beta, mean, var, *, stride,
               eps=1e-5):
    """Pure-JAX reference (NCHW) mirroring the PyTorch module in eval mode.

    Inputs are rounded to bf16 (matching the kernel's MXU operand precision) so
    the comparison isolates kernel logic from quantisation error.
    """
    k = conv_weight.shape[2]
    x = pixel_values.astype(jnp.bfloat16).astype(jnp.float32)
    w = conv_weight.astype(jnp.bfloat16).astype(jnp.float32)
    y = jax.lax.conv_general_dilated(
        x, w, window_strides=(stride, stride),
        padding=[(k // 2, k // 2), (k // 2, k // 2)],
        dimension_numbers=("NCHW", "OIHW", "NCHW"),
        precision=jax.lax.Precision.HIGHEST)
    s = (gamma / jnp.sqrt(var + eps))[None, :, None, None]
    b = (beta - mean * gamma / jnp.sqrt(var + eps))[None, :, None, None]
    y = jnp.maximum(y * s + b, 0.0)
    y = jax.lax.reduce_window(
        y, -jnp.inf, jax.lax.max,
        window_dimensions=(1, 1, 3, 3),
        window_strides=(1, 1, 2, 2),
        padding=((0, 0), (0, 0), (1, 1), (1, 1)))
    return y


if __name__ == "__main__":
    # Small synthetic config:
    #   num_channels=4, embedding_size=32, embedding_kernel_size=7,
    #   embedding_stride=2, embedding_pooling_with_downsample=True
    N, Cin, H, W = 2, 4, 16, 16
    Cemb, K, S = 32, 7, 2

    key = jax.random.PRNGKey(0)
    k1, k2, k3, k4, k5, k6 = jax.random.split(key, 6)
    x = jax.random.normal(k1, (N, Cin, H, W), jnp.float32)
    conv_w = 0.1 * jax.random.normal(k2, (Cemb, Cin, K, K), jnp.float32)
    bn_gamma = 1.0 + 0.1 * jax.random.normal(k3, (Cemb,), jnp.float32)
    bn_beta = 0.1 * jax.random.normal(k4, (Cemb,), jnp.float32)
    bn_mean = 0.1 * jax.random.normal(k5, (Cemb,), jnp.float32)
    bn_var = jnp.abs(jax.random.normal(k6, (Cemb,), jnp.float32)) + 0.5

    # row_tile=2 -> 2 pooled-row tiles per image, exercising the spatial grid axis.
    out = resnet_embeddings(x, conv_w, bn_gamma, bn_beta, bn_mean, bn_var,
                            stride=S, row_tile=2)
    out = jax.block_until_ready(out)

    ref = _reference(x, conv_w, bn_gamma, bn_beta, bn_mean, bn_var, stride=S)
    assert out.shape == ref.shape, (out.shape, ref.shape)
    max_err = float(jnp.max(jnp.abs(out - ref)))
    assert jnp.allclose(out, ref, atol=1e-2, rtol=1e-2), max_err

    print("KERNEL_OK")
</pallas_src>

<mosaic_0001>
module attributes {stable_mosaic.version = 11 : i64} {
  func.func @_embeddings_kernel(%arg0: i32, %arg1: i32, %arg2: memref<1x1x40x196xbf16, #tpu.memory_space<vmem>>, %arg3: memref<196x32xbf16, #tpu.memory_space<vmem>>, %arg4: memref<1x32xf32, #tpu.memory_space<vmem>>, %arg5: memref<1x32xf32, #tpu.memory_space<vmem>>, %arg6: memref<1x1x2x128xf32, #tpu.memory_space<vmem>>) attributes {dimension_semantics = [#tpu.dimension_semantics<parallel>, #tpu.dimension_semantics<parallel>], iteration_bounds = array<i64: 2, 2>, scalar_prefetch = 0 : i64, scratch_operands = 0 : i64, tpu.core_type = #tpu.core_type<tc>, window_params = [{transform_indices = @transform_0, window_bounds = array<i64: 1, 1, 40, 196>}, {pipeline_mode = #tpu.pipeline_mode<synchronous>, transform_indices = @transform_1, window_bounds = array<i64: 196, 32>}, {pipeline_mode = #tpu.pipeline_mode<synchronous>, transform_indices = @transform_2, window_bounds = array<i64: 1, 32>}, {pipeline_mode = #tpu.pipeline_mode<synchronous>, transform_indices = @transform_3, window_bounds = array<i64: 1, 32>}, {transform_indices = @transform_4, window_bounds = array<i64: 1, 1, 2, 128>}]} {
    %c0 = arith.constant 0 : index
    %c0_0 = arith.constant 0 : index
    %c0_1 = arith.constant 0 : index
    %c0_2 = arith.constant 0 : index
    %0 = vector.load %arg2[%c0, %c0_0, %c0_1, %c0_2] : memref<1x1x40x196xbf16, #tpu.memory_space<vmem>>, vector<1x1x40x196xbf16>
    %1 = vector.shape_cast %0 : vector<1x1x40x196xbf16> to vector<40x196xbf16>
    %c0_3 = arith.constant 0 : index
    %c0_4 = arith.constant 0 : index
    %2 = vector.load %arg3[%c0_3, %c0_4] : memref<196x32xbf16, #tpu.memory_space<vmem>>, vector<196x32xbf16>
    %cst = arith.constant dense<0.000000e+00> : vector<40x32xf32>
    %3 = tpu.matmul %1, %2, %cst {dimension_numbers = #tpu.dot_dimension_numbers<[1], [0], [0], [1], [0, 0, 1, 1], [], []>} : vector<40x196xbf16>, vector<196x32xbf16>, vector<40x32xf32> -> vector<40x32xf32>
    %c0_5 = arith.constant 0 : index
    %c0_6 = arith.constant 0 : index
    %4 = vector.load %arg4[%c0_5, %c0_6] : memref<1x32xf32, #tpu.memory_space<vmem>>, vector<1x32xf32>
    %5 = vector.broadcast %4 : vector<1x32xf32> to vector<40x32xf32>
    %6 = arith.mulf %3, %5 : vector<40x32xf32>
    %c0_7 = arith.constant 0 : index
    %c0_8 = arith.constant 0 : index
    %7 = vector.load %arg5[%c0_7, %c0_8] : memref<1x32xf32, #tpu.memory_space<vmem>>, vector<1x32xf32>
    %8 = vector.broadcast %7 : vector<1x32xf32> to vector<40x32xf32>
    %9 = arith.addf %6, %8 : vector<40x32xf32>
    %cst_9 = arith.constant 0.000000e+00 : f32
    %10 = vector.broadcast %cst_9 : f32 to vector<40x32xf32>
    %11 = arith.maximumf %9, %10 : vector<40x32xf32>
    %12 = vector.shape_cast %11 : vector<40x32xf32> to vector<5x8x32xf32>
    %c4_i32 = arith.constant 4 : i32
    %13 = arith.muli %c4_i32, %arg1 : i32
    %c1_i32 = arith.constant 1 : i32
    %14 = arith.subi %13, %c1_i32 : i32
    %15 = tpu.iota {dimensions = array<i32: 0>} : vector<5x1x1xi32>
    %16 = vector.broadcast %14 : i32 to vector<5x1x1xi32>
    %17 = arith.addi %16, %15 : vector<5x1x1xi32>
    %c0_i32 = arith.constant 0 : i32
    %18 = vector.broadcast %c0_i32 : i32 to vector<5x1x1xi32>
    %19 = arith.cmpi sge, %17, %18 : vector<5x1x1xi32>
    %c8_i32 = arith.constant 8 : i32
    %20 = vector.broadcast %c8_i32 : i32 to vector<5x1x1xi32>
    %21 = arith.cmpi slt, %17, %20 : vector<5x1x1xi32>
    %22 = arith.andi %19, %21 : vector<5x1x1xi1>
    %cst_10 = arith.constant 0.000000e+00 : f32
    %23 = vector.shape_cast %22 : vector<5x1x1xi1> to vector<5x1x1xi1>
    %24 = vector.broadcast %23 : vector<5x1x1xi1> to vector<5x8x32xi1>
    %25 = vector.broadcast %cst_10 : f32 to vector<5x8x32xf32>
    %26 = arith.select %24, %12, %25 : vector<5x8x32xi1>, vector<5x8x32xf32>
    %cst_11 = arith.constant 0.000000e+00 : f32
    %27 = vector.broadcast %cst_11 : f32 to vector<5x1x32xf32>
    %28 = vector.extract_strided_slice %26 {offsets = [0, 0, 0], sizes = [5, 7, 32], strides = [1, 1, 1]} : vector<5x8x32xf32> to vector<5x7x32xf32>
    %29 = tpu.concatenate %27, %28 in 1 : vector<5x1x32xf32>, vector<5x7x32xf32> -> vector<5x8x32xf32>
    %30 = arith.maximumf %26, %29 : vector<5x8x32xf32>
    %31 = vector.shape_cast %30 : vector<5x8x32xf32> to vector<20x2x32xf32>
    %cst_12 = arith.constant dense<0xFF800000> : vector<20x32xf32>
    %32 = vector.multi_reduction <maximumf>, %31, %cst_12 [1] : vector<20x2x32xf32> to vector<20x32xf32>
    %33 = vector.shape_cast %32 : vector<20x32xf32> to vector<5x4x32xf32>
    %34 = vector.extract_strided_slice %33 {offsets = [0, 0, 0], sizes = [4, 4, 32], strides = [1, 1, 1]} : vector<5x4x32xf32> to vector<4x4x32xf32>
    %35 = vector.extract_strided_slice %33 {offsets = [1, 0, 0], sizes = [4, 4, 32], strides = [1, 1, 1]} : vector<5x4x32xf32> to vector<4x4x32xf32>
    %36 = arith.maximumf %34, %35 : vector<4x4x32xf32>
    %37 = vector.shape_cast %36 : vector<4x4x32xf32> to vector<4x128xf32>
    %38 = vector.shape_cast %37 : vector<4x128xf32> to vector<2x2x128xf32>
    %cst_13 = arith.constant dense<0xFF800000> : vector<2x128xf32>
    %39 = vector.multi_reduction <maximumf>, %38, %cst_13 [1] : vector<2x2x128xf32> to vector<2x128xf32>
    %c0_14 = arith.constant 0 : index
    %c0_15 = arith.constant 0 : index
    %c0_16 = arith.constant 0 : index
    %c0_17 = arith.constant 0 : index
    %40 = vector.load %arg6[%c0_14, %c0_15, %c0_16, %c0_17] : memref<1x1x2x128xf32, #tpu.memory_space<vmem>>, vector<1x1x2x128xf32>
    %41 = vector.shape_cast %40 : vector<1x1x2x128xf32> to vector<2x128xf32>
    %42 = vector.shape_cast %39 : vector<2x128xf32> to vector<1x1x2x128xf32>
    tpu.vector_store %arg6[%c0_14, %c0_15, %c0_16, %c0_17], %42 {strides = array<i32>} : memref<1x1x2x128xf32, #tpu.memory_space<vmem>>, vector<1x1x2x128xf32>,
    return
  }
  func.func @transform_0(%arg0: i32, %arg1: i32) -> (i32, i32, i32, i32) {
    %c0_i32 = arith.constant 0 : i32
    %c0_i32_0 = arith.constant 0 : i32
    %c0_i32_1 = arith.constant 0 : i32
    return %arg0, %arg1, %c0_i32, %c0_i32_0 : i32, i32, i32, i32
  }
  func.func @transform_1(%arg0: i32, %arg1: i32) -> (i32, i32) {
    %c0_i32 = arith.constant 0 : i32
    %c0_i32_0 = arith.constant 0 : i32
    %c0_i32_1 = arith.constant 0 : i32
    return %c0_i32, %c0_i32_0 : i32, i32
  }
  func.func @transform_2(%arg0: i32, %arg1: i32) -> (i32, i32) {
    %c0_i32 = arith.constant 0 : i32
    %c0_i32_0 = arith.constant 0 : i32
    %c0_i32_1 = arith.constant 0 : i32
    return %c0_i32, %c0_i32_0 : i32, i32
  }
  func.func @transform_3(%arg0: i32, %arg1: i32) -> (i32, i32) {
    %c0_i32 = arith.constant 0 : i32
    %c0_i32_0 = arith.constant 0 : i32
    %c0_i32_1 = arith.constant 0 : i32
    return %c0_i32, %c0_i32_0 : i32, i32
  }
  func.func @transform_4(%arg0: i32, %arg1: i32) -> (i32, i32, i32, i32) {
    %c0_i32 = arith.constant 0 : i32
    %c0_i32_0 = arith.constant 0 : i32
    %c0_i32_1 = arith.constant 0 : i32
    return %arg0, %arg1, %c0_i32, %c0_i32_0 : i32, i32, i32, i32
  }
}

</mosaic_0001>

<llo_original>
// kernel: tpu_custom_call.1
$region0: #{tpu_custom_call.1}
  #allocation0 [shape = 'u32[]', space=smem, size = 0x4, offset = 0x4, fixed_abs, tag = 'smem constant byte address 0x4 - core index']
  #allocation1 [shape = 'u32[144,128]{1,0:T(1,128)}', space=vmem, size = 0x12000, scoped, tag = 'internal scratch']
  %s0 = inlined_call_operand.hbm [shape: bf16[2,2,40,196], index: 0, kind: input, shape index: {}]
  %s1 = inlined_call_operand.vmem [shape: bf16[196,32], index: 1, kind: input, shape index: {}]
  %s2 = inlined_call_operand.vmem [shape: f32[1,32], index: 2, kind: input, shape index: {}]
  %s3 = inlined_call_operand.vmem [shape: f32[1,32], index: 3, kind: input, shape index: {}]
  %s4 = inlined_call_operand.hbm [shape: f32[2,2,2,128], index: 4, kind: output, shape index: {}]
  %s5 = sld [smem:[#allocation0]]
  $region53: #{tpu_custom_call.1} parent=0
    _
  %s7 = ssub.s32 1, %s5
  %s8 = scalar_select 0, %s7, %s5
  $region1: #{tpu_custom_call.1} parent=0
    #allocation2 [shape = 'u8[40960]{0}', space=vmem, size = 0xa000, scoped, tag = 'input window, operand 0']
    #allocation3 [shape = 's32[2]{0}', space=sflag, size = 0x8, scoped, tag = 'scoped memory for tpu_custom_call.1']
    #allocation4 [shape = 's32[2]{0}', space=sflag, size = 0x8, scoped, tag = 'scoped memory for tpu_custom_call.1']
    #allocation5 [shape = 'u8[2048]{0}', space=vmem, size = 0x800, scoped, tag = 'output window, operand 0']
    %9 = vsyncpa [#allocation3], 0
    %s10 = scalar_lea.sflag [#allocation3], 1
    %11 = vsyncpa %s10, 0
    %12 = vsyncpa [#allocation4], 0
    %s13 = scalar_lea.sflag [#allocation4], 1
    %14 = vsyncpa %s13, 0
    loop: start=0, step=1, limit=6
    $region2: #{tpu_custom_call.1} parent=1 // loop_pre_header
      _
    $region3: #{tpu_custom_call.1} parent=1 // loop_header
      %s16 = sphi 0, %s20
      %p17 = scmp.ge.s32.totalorder %s16, 6
      %s23 = sphi 0, %s35
      %s24 = sphi 0, %s31
      %s25 = sphi 0, %s23
      %s26 = sphi 0, %s24
      %s27 = sphi 0, %s25
      %s28 = sphi 0, %s26
      %s40 = sphi 0, %s42
      %s43 = sphi 0, %s40
      %s44 = sphi 0, %s43
      %s60 = sphi 0, %s44
      %s64 = sphi 0, %s64
      %s66 = sphi 0, %s64
      %s67 = sphi 0, %s66
      %s81 = sphi 0, %s67
      %s85 = sphi 0, %s85
      %s87 = sphi 0, %s85
      %s88 = sphi 0, %s87
      %s102 = sphi 0, %s88
      %s106 = sphi 0, %s106
      %s108 = sphi 0, %s106
      %s109 = sphi 0, %s108
      %s123 = sphi 0, %s109
      %s131 = sphi 0, %s133
      %s134 = sphi 0, %s131
      %s135 = sphi 0, %s134
      %s151 = sphi 0, %s135
    $region4: #{tpu_custom_call.1} parent=1 // loop_header_branch
      %19 = sbr.rel (%p17) target = $region8
    $region5: #{tpu_custom_call.1} parent=1 // loop_body
      %s21 = ssub.s32 %s16, 1
      %s22 = ssub.s32 %s16, 2
      %s29 = sadd.s32 1, %s24
      %p30 = scmp.ge.s32.totalorder %s29, 2
      %s31 = scalar_select %p30, 0, %s29
      %s32 = sadd.s32 1, %s23
      %s33 = scalar_select %p30, %s32, %s23
      %p34 = scmp.ge.s32.totalorder %s33, 2
      %s35 = scalar_select %p34, 0, %s33
      %s36 = ssub.s32 %s23, %s35
      %s37 = ssub.s32 %s24, %s31
      %s38 = sor.u32 %s36, %s37
      %p39 = scmp.eq.s32.totalorder %s38, 0
      %s41 = sadd.s32 %s40, 1
      %s42 = scalar_select %p39, %s40, %s41
      %p45 = pneg %p39
      %p46 = scmp.eq.s32.totalorder %s16, 3
      %p47 = por %p45, %p46
      %p48 = scmp.ne.s32.totalorder %s40, %s43
      %p49 = scmp.eq.s32.totalorder %s16, 0
      %p50 = por %p48, %p49
      %p51 = scmp.ne.s32.totalorder %s40, %s43
      %p52 = scmp.eq.s32.totalorder %s21, 3
      %p53 = por %p51, %p52
      %p54 = scmp.ne.s32.totalorder %s43, %s44
      %p55 = scmp.eq.s32.totalorder %s21, 0
      %p56 = por %p54, %p55
      %p57 = scmp.ne.s32.totalorder %s43, %s44
      %p58 = scmp.eq.s32.totalorder %s22, 3
      %p59 = por %p57, %p58
      %p61 = scmp.ne.s32.totalorder %s44, %s60
      %p62 = scmp.eq.s32.totalorder %s22, 0
      %p63 = por %p61, %p62
      %s65 = sadd.s32 %s64, 1
      %p68 = scmp.eq.s32.totalorder %s16, 3
      %p69 = scmp.ne.s32.totalorder %s64, %s66
      %p70 = scmp.eq.s32.totalorder %s16, 0
      %p71 = por %p69, %p70
      %p72 = scmp.ne.s32.totalorder %s64, %s66
      %p73 = scmp.eq.s32.totalorder %s21, 3
      %p74 = por %p72, %p73
      %p75 = scmp.ne.s32.totalorder %s66, %s67
      %p76 = scmp.eq.s32.totalorder %s21, 0
      %p77 = por %p75, %p76
      %p78 = scmp.ne.s32.totalorder %s66, %s67
      %p79 = scmp.eq.s32.totalorder %s22, 3
      %p80 = por %p78, %p79
      %p82 = scmp.ne.s32.totalorder %s67, %s81
      %p83 = scmp.eq.s32.totalorder %s22, 0
      %p84 = por %p82, %p83
      %s86 = sadd.s32 %s85, 1
      %p89 = scmp.eq.s32.totalorder %s16, 3
      %p90 = scmp.ne.s32.totalorder %s85, %s87
      %p91 = scmp.eq.s32.totalorder %s16, 0
      %p92 = por %p90, %p91
      %p93 = scmp.ne.s32.totalorder %s85, %s87
      %p94 = scmp.eq.s32.totalorder %s21, 3
      %p95 = por %p93, %p94
      %p96 = scmp.ne.s32.totalorder %s87, %s88
      %p97 = scmp.eq.s32.totalorder %s21, 0
      %p98 = por %p96, %p97
      %p99 = scmp.ne.s32.totalorder %s87, %s88
      %p100 = scmp.eq.s32.totalorder %s22, 3
      %p101 = por %p99, %p100
      %p103 = scmp.ne.s32.totalorder %s88, %s102
      %p104 = scmp.eq.s32.totalorder %s22, 0
      %p105 = por %p103, %p104
      %s107 = sadd.s32 %s106, 1
      %p110 = scmp.eq.s32.totalorder %s16, 3
      %p111 = scmp.ne.s32.totalorder %s106, %s108
      %p112 = scmp.eq.s32.totalorder %s16, 0
      %p113 = por %p111, %p112
      %p114 = scmp.ne.s32.totalorder %s106, %s108
      %p115 = scmp.eq.s32.totalorder %s21, 3
      %p116 = por %p114, %p115
      %p117 = scmp.ne.s32.totalorder %s108, %s109
      %p118 = scmp.eq.s32.totalorder %s21, 0
      %p119 = por %p117, %p118
      %p120 = scmp.ne.s32.totalorder %s108, %s109
      %p121 = scmp.eq.s32.totalorder %s22, 3
      %p122 = por %p120, %p121
      %p124 = scmp.ne.s32.totalorder %s109, %s123
      %p125 = scmp.eq.s32.totalorder %s22, 0
      %p126 = por %p124, %p125
      %s127 = ssub.s32 %s23, %s35
      %s128 = ssub.s32 %s24, %s31
      %s129 = sor.u32 %s127, %s128
      %p130 = scmp.eq.s32.totalorder %s129, 0
      %s132 = sadd.s32 %s131, 1
      %s133 = scalar_select %p130, %s131, %s132
      %p136 = pneg %p130
      %p137 = scmp.eq.s32.totalorder %s16, 3
      %p138 = por %p136, %p137
      %p139 = scmp.ne.s32.totalorder %s131, %s134
      %p140 = scmp.eq.s32.totalorder %s16, 0
      %p141 = por %p139, %p140
      %p142 = scmp.ne.s32.totalorder %s131, %s134
      %p143 = scmp.eq.s32.totalorder %s21, 3
      %p144 = por %p142, %p143
      %p145 = scmp.ne.s32.totalorder %s134, %s135
      %p146 = scmp.eq.s32.totalorder %s21, 0
      %p147 = por %p145, %p146
      %p148 = scmp.ne.s32.totalorder %s134, %s135
      %p149 = scmp.eq.s32.totalorder %s22, 3
      %p150 = por %p148, %p149
      %p152 = scmp.ne.s32.totalorder %s135, %s151
      %p153 = scmp.eq.s32.totalorder %s22, 0
      %p154 = por %p152, %p153
      %p155 = scmp.le.s32.totalorder 1, %s16
      %p156 = scmp.lt.s32.totalorder %s16, 5
      %p157 = pnand %p155, %p156
      %p158 = pneg %p157
      // Predicated region
      $region9: #{tpu_custom_call.1} parent=5 // pred_check
        _
      $region10: #{tpu_custom_call.1} parent=5 // pred_check_branch
        %160 = sbr.rel (%p157) target = $region12
      $region11: #{tpu_custom_call.1} parent=5 // pred_region
        %s161 = ssub.s32 %s16, 1
        // Predicated region
        $region13: #{tpu_custom_call.1} parent=11 // pred_check
          %p162 = pneg %p77
        $region14: #{tpu_custom_call.1} parent=11 // pred_check_branch
          %164 = sbr.rel (%p162) target = $region16
        $region15: #{tpu_custom_call.1} parent=11 // pred_region
          _
        $region16: #{tpu_custom_call.1} parent=11 // pred_fallthru
          _
        // Predicated region
        $region17: #{tpu_custom_call.1} parent=11 // pred_check
          %p165 = pneg %p98
        $region18: #{tpu_custom_call.1} parent=11 // pred_check_branch
          %167 = sbr.rel (%p165) target = $region20
        $region19: #{tpu_custom_call.1} parent=11 // pred_region
          _
        $region20: #{tpu_custom_call.1} parent=11 // pred_fallthru
          _
        // Predicated region
        $region21: #{tpu_custom_call.1} parent=11 // pred_check
          %p168 = pneg %p119
        $region22: #{tpu_custom_call.1} parent=11 // pred_check_branch
          %170 = sbr.rel (%p168) target = $region24
        $region23: #{tpu_custom_call.1} parent=11 // pred_region
          _
        $region24: #{tpu_custom_call.1} parent=11 // pred_fallthru
          _
      $region12: #{tpu_custom_call.1} parent=5 // pred_fallthru
        _
      %p171 = scmp.lt.s32.totalorder %s16, 4
      // Predicated region
      $region25: #{tpu_custom_call.1} parent=5 // pred_check
        %p172 = pneg %p171
      $region26: #{tpu_custom_call.1} parent=5 // pred_check_branch
        %174 = sbr.rel (%p172) target = $region28
      $region27: #{tpu_custom_call.1} parent=5 // pred_region
        // Predicated region
        $region29: #{tpu_custom_call.1} parent=27 // pred_check
          %p175 = pneg %p50
        $region30: #{tpu_custom_call.1} parent=27 // pred_check_branch
          %177 = sbr.rel (%p175) target = $region32
        $region31: #{tpu_custom_call.1} parent=27 // pred_region
          %s178 = sand.u32 %s40, 1
          %s179 = scalar_lea.sflag [#allocation3], %s178
          %s180 = sand.u32 %s40, 1
          %s181 = smul.addr %s180, 40
          %s182 = scalar_lea.vmem [#allocation2], %s181
          %s184 = ssub.s32 640, 640
          %185 = vsyncadd %s179, %s184
          %s186 = smul.addr %s24, 10
          %s187 = smul.addr %s23, 20
          %s188 = sadd.s32 %s186, %s187
          %s189 = smul.addr %s188, 64
          %s190 = scalar_lea.hbm %s0, %s189
          %s191 = sshll.u32 %s182, 4
          %s192 = int_to_ptr.vmem [resolvable:$true] %s191
          %197 = dma.hbm_to_vmem [thread:$0]  %s190, 640, %s192, %s179, 128, 128, 8
        $region32: #{tpu_custom_call.1} parent=27 // pred_fallthru
          _
      $region28: #{tpu_custom_call.1} parent=5 // pred_fallthru
        _
      %p198 = scmp.le.s32.totalorder 1, %s16
      %p199 = scmp.lt.s32.totalorder %s16, 5
      %p200 = pnand %p198, %p199
      %p201 = pneg %p200
      // Predicated region
      $region33: #{tpu_custom_call.1} parent=5 // pred_check
        _
      $region34: #{tpu_custom_call.1} parent=5 // pred_check_branch
        %203 = sbr.rel (%p200) target = $region36
      $region35: #{tpu_custom_call.1} parent=5 // pred_region
        %s204 = ssub.s32 %s16, 1
        %s205 = sand.u32 %s43, 1
        %s206 = scalar_lea.sflag [#allocation3], %s205
        %s207 = sand.u32 %s43, 1
        %s208 = smul.addr %s207, 40
        %s209 = scalar_lea.vmem [#allocation2], %s208
        // Predicated region
        $region37: #{tpu_custom_call.1} parent=35 // pred_check
          %p210 = pneg %p56
        $region38: #{tpu_custom_call.1} parent=35 // pred_check_branch
          %212 = sbr.rel (%p210) target = $region40
        $region39: #{tpu_custom_call.1} parent=35 // pred_region
          %213 = dma.done %s206, 640
        $region40: #{tpu_custom_call.1} parent=35 // pred_fallthru
          _
        %s214 = sand.u32 %s43, 1
        %s215 = scalar_lea.sflag [#allocation3], %s214
        %s216 = sand.u32 %s43, 1
        %s217 = smul.addr %s216, 40
        %s218 = scalar_lea.vmem [#allocation2], %s217
        %p219 = pneg %p56
        %p220 = pneg %p53
        %p221 = pneg %p77
        %p222 = pneg %p74
        %p223 = pneg %p98
        %p224 = pneg %p95
        %p225 = pneg %p119
        %p226 = pneg %p116
        %p227 = pneg %p147
        %p228 = pneg %p144
        %s229 = sand.u32 %s134, 1
        %s230 = scalar_lea.sflag [#allocation4], %s229
        %s231 = sand.u32 %s134, 1
        %s232 = smul.addr %s231, 2
        %s233 = scalar_lea.vmem [#allocation5], %s232
        %v235 = vld [vmem:[%s209] sm:$0xff]
        %v236 = vld [vmem:[%s209 + $0x8] sm:$0xff]
        %v237 = vld [vmem:[%s209 + $0x10] sm:$0xff]
        %v238 = vld [vmem:[%s209 + $0x18] sm:$0xff]
        %v239 = vld [vmem:[%s209 + $0x20] sm:$0xff]
        %v240 = vld [vmem:[%s1] sm:$0xf]
        %v241 = vld [vmem:[%s1 + $0x4] sm:$0xf]
        %v242 = vld [vmem:[%s1 + $0x8] sm:$0xf]
        %v243 = vld [vmem:[%s1 + $0xc] sm:$0xf]
        %v244 = vld [vmem:[%s1 + $0x10] sm:$0xf]
        %v245 = vld [vmem:[%s1 + $0x14] sm:$0xf]
        %v246 = vld [vmem:[%s1 + $0x18] sm:$0xf]
        %v247 = vld [vmem:[%s1 + $0x1c] sm:$0xf]
        %v248 = vld [vmem:[%s1 + $0x20] sm:$0xf]
        %v249 = vld [vmem:[%s1 + $0x24] sm:$0xf]
        %v250 = vld [vmem:[%s1 + $0x28] sm:$0xf]
        %v251 = vld [vmem:[%s1 + $0x2c] sm:$0xf]
        %v252 = vld [vmem:[%s1 + $0x30] sm:$0xf]
        %v253 = vld [vmem:[%s1 + $0x34] sm:$0xf]
        %v254 = vld [vmem:[%s1 + $0x38] sm:$0xf]
        %v255 = vld [vmem:[%s1 + $0x3c] sm:$0xf]
        %v256 = vld [vmem:[%s1 + $0x40] sm:$0xf]
        %v257 = vld [vmem:[%s1 + $0x44] sm:$0xf]
        %v258 = vld [vmem:[%s1 + $0x48] sm:$0xf]
        %v259 = vld [vmem:[%s1 + $0x4c] sm:$0xf]
        %v260 = vld [vmem:[%s1 + $0x50] sm:$0xf]
        %v261 = vld [vmem:[%s1 + $0x54] sm:$0xf]
        %v262 = vld [vmem:[%s1 + $0x58] sm:$0xf]
        %v263 = vld [vmem:[%s1 + $0x5c] sm:$0xf]
        %v264 = vld [vmem:[%s1 + $0x60] sm:$0x3]
        %v270 = vunpack.c.l.b16 %v235
        %v271 = vunpack.c.h.b16 %v235
        %v272 = vunpack.c.l.b16 %v236
        %v273 = vunpack.c.h.b16 %v236
        %v274 = vunpack.c.l.b16 %v237
        %v275 = vunpack.c.h.b16 %v237
        %v276 = vunpack.c.l.b16 %v238
        %v277 = vunpack.c.h.b16 %v238
        %v278 = vunpack.c.l.b16 %v239
        %v279 = vunpack.c.h.b16 %v239
        %v280 = vpack.c.b16 %v272, %v270
        %v281 = vpack.c.b16 %v273, %v271
        %v282 = vpack.c.b16 %v276, %v274
        %v283 = vpack.c.b16 %v277, %v275
        %v284 = vpack.c.b16 %v278, %v278
        %v285 = vpack.c.b16 %v279, %v279
        %v314 = vunpack.c.l.b16 %v240
        %v315 = vunpack.c.l.b16 %v241
        %v316 = vunpack.c.l.b16 %v242
        %v317 = vunpack.c.l.b16 %v243
        %v318 = vunpack.c.l.b16 %v244
        %v319 = vunpack.c.l.b16 %v245
        %v320 = vunpack.c.l.b16 %v246
        %v321 = vunpack.c.l.b16 %v247
        %v322 = vunpack.c.l.b16 %v248
        %v323 = vunpack.c.l.b16 %v249
        %v324 = vunpack.c.l.b16 %v250
        %v325 = vunpack.c.l.b16 %v251
        %v326 = vunpack.c.l.b16 %v252
        %v327 = vunpack.c.l.b16 %v253
        %v328 = vunpack.c.l.b16 %v254
        %v329 = vunpack.c.l.b16 %v255
        %v330 = vunpack.c.l.b16 %v256
        %v331 = vunpack.c.l.b16 %v257
        %v332 = vunpack.c.l.b16 %v258
        %v333 = vunpack.c.l.b16 %v259
        %v334 = vunpack.c.l.b16 %v260
        %v335 = vunpack.c.l.b16 %v261
        %v336 = vunpack.c.l.b16 %v262
        %v337 = vunpack.c.l.b16 %v263
        %v338 = vunpack.c.l.b16 %v264
        %v339 = vpack.c.b16 %v315, %v314
        %v340 = vpack.c.b16 %v317, %v316
        %v341 = vpack.c.b16 %v319, %v318
        %v342 = vpack.c.b16 %v321, %v320
        %v343 = vpack.c.b16 %v323, %v322
        %v344 = vpack.c.b16 %v325, %v324
        %v345 = vpack.c.b16 %v327, %v326
        %v346 = vpack.c.b16 %v329, %v328
        %v347 = vpack.c.b16 %v331, %v330
        %v348 = vpack.c.b16 %v333, %v332
        %v349 = vpack.c.b16 %v335, %v334
        %v350 = vpack.c.b16 %v337, %v336
        %v351 = vpack.c.b16 %v338, %v338
        %vm364 = vcmask 556032
        %v366 = vsel %vm364, %v281, 0
        %v369 = vsel %vm364, %v283, 0
        %v372 = vsel %vm364, %v285, 0
        %vm374 = vcmask 1041408
        %v376 = vsel %vm374, %v351, 0
        %378 = vmatprep.subr.bf16.mxu0 0
        %379 = vmatpush1.bf16.msra.mxu0 %v346
        %380 = vmatprep.subr.bf16.mxu0 0
        %381 = vmatpush1.bf16.msra.mxu0 %v345
        %382 = vmatprep.subr.bf16.mxu0 0
        %383 = vmatpush1.bf16.msra.mxu0 %v344
        %384 = vmatprep.subr.bf16.mxu0 0
        %385 = vmatpush1.bf16.msra.mxu0 %v343
        %386 = vmatprep.subr.bf16.mxu0 0
        %387 = vmatpush1.bf16.msra.mxu0 %v342
        %388 = vmatprep.subr.bf16.mxu0 0
        %389 = vmatpush1.bf16.msra.mxu0 %v341
        %390 = vmatprep.subr.bf16.mxu0 0
        %391 = vmatpush1.bf16.msra.mxu0 %v340
        %392 = vmatprep.subr.bf16.mxu0 0
        %393 = vmatpush1.bf16.msra.mxu0 %v339
        %394 = vmatprep.subr.bf16.mxu0 0
        %395 = vmatpush2.bf16.msra.mxu0 0
        %396 = vmatprep.subr.bf16.mxu0 0
        %397 = vmatpush2.bf16.msra.mxu0 0
        %398 = vmatprep.subr.bf16.mxu0 0
        %399 = vmatpush2.bf16.msra.mxu0 0
        %400 = vmatprep.subr.bf16.mxu0 0
        %401 = vmatpush2.bf16.msra.mxu0 %v376
        %402 = vmatprep.subr.bf16.mxu0 0
        %403 = vmatpush2.bf16.msra.mxu0 %v350
        %404 = vmatprep.subr.bf16.mxu0 0
        %405 = vmatpush2.bf16.msra.mxu0 %v349
        %406 = vmatprep.subr.bf16.mxu0 0
        %407 = vmatpush2.bf16.msra.mxu0 %v348
        %408 = vmatprep.subr.bf16.mxu0 0
        %409 = vmatpush2.bf16.msra.mxu0 %v347
        %410 = vmatprep.mubr.bf16.mxu0 %v366
        %411 = vmatmul.mubr.bf16.gmra.mxu0 %v280
        %v412 = vpop.f32.mrf.mxu0
        %v413 = vadd.f32 0.0, %v412
        %v414 = vpop.f32.mrf.mxu0
        %v415 = vpop.f32.mrf.mxu0
        %v416 = vadd.f32 0.0, %v415
        %v417 = vpop.f32.mrf.mxu0
        %418 = vmatprep.mubr.bf16.mxu0 %v369
        %419 = vmatmul.mubr.bf16.gmra.mxu0 %v282
        %v420 = vpop.f32.mrf.mxu0
        %v421 = vadd.f32 0.0, %v420
        %v422 = vpop.f32.mrf.mxu0
        %v423 = vpop.f32.mrf.mxu0
        %v424 = vadd.f32 0.0, %v423
        %v425 = vpop.f32.mrf.mxu0
        %426 = vmatprep.mubr.bf16.mxu0 %v372
        %427 = vmatmul.mubr.bf16.gmra.mxu0 %v284
        %v428 = vpop.f32.mrf.mxu0
        %v429 = vadd.f32 0.0, %v428
        %v430 = vpop.f32.mrf.mxu0
        %v431 = vpop.f32.mrf.mxu0
        %v432 = vpop.f32.mrf.mxu0
        %433 = vdwg.mxu0
        %v434 = vld [vmem:[%s2] sm:$0x1]
        %v436 = vlaneseq
        %v437 = vshrl.u32 %v436, 7
        %v438 = vsub.s32 0, %v437
        %v439 = vrot.slane %v434, %v438
        %v441 = vmul.f32 %v413, %v439
        %v442 = vmul.f32 %v416, %v439
        %v443 = vmul.f32 %v421, %v439
        %v444 = vmul.f32 %v424, %v439
        %v445 = vmul.f32 %v429, %v439
        %v446 = vld [vmem:[%s3] sm:$0x1]
        %v448 = vlaneseq
        %v449 = vshrl.u32 %v448, 7
        %v450 = vsub.s32 0, %v449
        %v451 = vrot.slane %v446, %v450
        %v453 = vadd.f32 %v441, %v451
        %v454 = vadd.f32 %v442, %v451
        %v455 = vadd.f32 %v443, %v451
        %v456 = vadd.f32 %v444, %v451
        %v457 = vadd.f32 %v445, %v451
        %v458 = vmax.f32 %v453, 0.0
        %v459 = vmax.f32 %v454, 0.0
        %v460 = vmax.f32 %v455, 0.0
        %v461 = vmax.f32 %v456, 0.0
        %v462 = vmax.f32 %v457, 0.0
        %s463 = smul.u32 %s26, 4
        %s464 = ssub.s32 %s463, 1
        %v465 = vstv %s464
        %v466 = vadd.s32 %v465, 1
        %v467 = vadd.s32 %v465, 2
        %v468 = vadd.s32 %v465, 3
        %v469 = vadd.s32 %v465, 4
        %vm470 = vcmp.ge.s32.totalorder %v465, 0
        %vm471 = vcmp.ge.s32.totalorder %v466, 0
        %vm472 = vcmp.ge.s32.totalorder %v467, 0
        %vm473 = vcmp.ge.s32.totalorder %v468, 0
        %vm474 = vcmp.ge.s32.totalorder %v469, 0
        %vm475 = vcmp.lt.s32.totalorder %v465, 8
        %vm476 = vcmp.lt.s32.totalorder %v466, 8
        %vm477 = vcmp.lt.s32.totalorder %v467, 8
        %vm478 = vcmp.lt.s32.totalorder %v468, 8
        %vm479 = vcmp.lt.s32.totalorder %v469, 8
        %vm480 = vmand %vm470, %vm475
        %vm481 = vmand %vm471, %vm476
        %vm482 = vmand %vm472, %vm477
        %vm483 = vmand %vm473, %vm478
        %vm484 = vmand %vm474, %vm479
        %v485 = vsel %vm480, 1, 0
        %v486 = vsel %vm481, 1, 0
        %v487 = vsel %vm482, 1, 0
        %v488 = vsel %vm483, 1, 0
        %v489 = vsel %vm484, 1, 0
        %vm490 = vcmp.eq.s32.totalorder %v485, 1
        %vm491 = vcmp.eq.s32.totalorder %v486, 1
        %vm492 = vcmp.eq.s32.totalorder %v487, 1
        %vm493 = vcmp.eq.s32.totalorder %v488, 1
        %vm494 = vcmp.eq.s32.totalorder %v489, 1
        %v495 = vsel %vm490, %v458, 0.0
        %v496 = vsel %vm491, %v459, 0.0
        %v497 = vsel %vm492, %v460, 0.0
        %v498 = vsel %vm493, %v461, 0.0
        %v499 = vsel %vm494, %v462, 0.0
        %v505 = vrot.slane %v495, 7
        %v506 = vrot.slane %v496, 7
        %v507 = vrot.slane %v497, 7
        %v508 = vrot.slane %v498, 7
        %v509 = vrot.slane %v499, 7
        %vm515 = vcmask 1040384
        %v516 = vsel %vm515, 0.0, %v505
        %v517 = vsel %vm515, 0.0, %v506
        %v518 = vsel %vm515, 0.0, %v507
        %v519 = vsel %vm515, 0.0, %v508
        %v520 = vsel %vm515, 0.0, %v509
        %v521 = vmax.f32 %v495, %v516
        %v522 = vmax.f32 %v496, %v517
        %v523 = vmax.f32 %v497, %v518
        %v524 = vmax.f32 %v498, %v519
        %v525 = vmax.f32 %v499, %v520
        %v531 = vcombine.high %v521, %v521
        %v533 = vunpack.c.l.s4 1983009808
        %v534 = vunpack.c.0.s8 %v533
        %v535 = vlaneseq
        %v536 = vshrl.u32 %v535, 7
        %v537 = vsub.s32 %v534, %v536
        %v538 = vrot.slane %v521, %v537
        %v540 = vunpack.c.l.s4 1983009808
        %v541 = vunpack.c.0.s8 %v540
        %v542 = vlaneseq
        %v543 = vshrl.u32 %v542, 7
        %v544 = vsub.s32 %v541, %v543
        %v545 = vrot.slane %v531, %v544
        %v546 = vcombine.high %v538, %v538
        %v547 = vcombine.high %v545, %v545
        %v548 = vcombine.high %v522, %v522
        %v550 = vunpack.c.l.s4 1983009808
        %v551 = vunpack.c.0.s8 %v550
        %v552 = vlaneseq
        %v553 = vshrl.u32 %v552, 7
        %v554 = vsub.s32 %v551, %v553
        %v555 = vrot.slane %v522, %v554
        %v557 = vunpack.c.l.s4 1983009808
        %v558 = vunpack.c.0.s8 %v557
        %v559 = vlaneseq
        %v560 = vshrl.u32 %v559, 7
        %v561 = vsub.s32 %v558, %v560
        %v562 = vrot.slane %v548, %v561
        %v563 = vcombine.high %v555, %v555
        %v564 = vcombine.high %v562, %v562
        %v565 = vcombine.high %v523, %v523
        %v567 = vunpack.c.l.s4 1983009808
        %v568 = vunpack.c.0.s8 %v567
        %v569 = vlaneseq
        %v570 = vshrl.u32 %v569, 7
        %v571 = vsub.s32 %v568, %v570
        %v572 = vrot.slane %v523, %v571
        %v574 = vunpack.c.l.s4 1983009808
        %v575 = vunpack.c.0.s8 %v574
        %v576 = vlaneseq
        %v577 = vshrl.u32 %v576, 7
        %v578 = vsub.s32 %v575, %v577
        %v579 = vrot.slane %v565, %v578
        %v580 = vcombine.high %v572, %v572
        %v581 = vcombine.high %v579, %v579
        %v582 = vcombine.high %v524, %v524
        %v584 = vunpack.c.l.s4 1983009808
        %v585 = vunpack.c.0.s8 %v584
        %v586 = vlaneseq
        %v587 = vshrl.u32 %v586, 7
        %v588 = vsub.s32 %v585, %v587
        %v589 = vrot.slane %v524, %v588
        %v591 = vunpack.c.l.s4 1983009808
        %v592 = vunpack.c.0.s8 %v591
        %v593 = vlaneseq
        %v594 = vshrl.u32 %v593, 7
        %v595 = vsub.s32 %v592, %v594
        %v596 = vrot.slane %v582, %v595
        %v597 = vcombine.high %v589, %v589
        %v598 = vcombine.high %v596, %v596
        %v599 = vcombine.high %v525, %v525
        %v601 = vunpack.c.l.s4 1983009808
        %v602 = vunpack.c.0.s8 %v601
        %v603 = vlaneseq
        %v604 = vshrl.u32 %v603, 7
        %v605 = vsub.s32 %v602, %v604
        %v606 = vrot.slane %v525, %v605
        %v608 = vunpack.c.l.s4 1983009808
        %v609 = vunpack.c.0.s8 %v608
        %v610 = vlaneseq
        %v611 = vshrl.u32 %v610, 7
        %v612 = vsub.s32 %v609, %v611
        %v613 = vrot.slane %v599, %v612
        %v614 = vcombine.high %v606, %v606
        %v615 = vcombine.high %v613, %v613
        %vm636 = vcmask 254976
        %v637 = vsel %vm636, %v538, -inf
        %v638 = vrot.slane %v637, 4
        %v639 = vmax.f32 %v637, %v638
        %v640 = vrot.slane %v639, 2
        %v641 = vmax.f32 %v639, %v640
        %v642 = vrot.slane %v641, 1
        %v643 = vmax.f32 %v641, %v642
        %v644 = vsel %vm636, %v546, -inf
        %v645 = vrot.slane %v644, 4
        %v646 = vmax.f32 %v644, %v645
        %v647 = vrot.slane %v646, 2
        %v648 = vmax.f32 %v646, %v647
        %v649 = vrot.slane %v648, 1
        %v650 = vmax.f32 %v648, %v649
        %v651 = vsel %vm636, %v545, -inf
        %v652 = vrot.slane %v651, 4
        %v653 = vmax.f32 %v651, %v652
        %v654 = vrot.slane %v653, 2
        %v655 = vmax.f32 %v653, %v654
        %v656 = vrot.slane %v655, 1
        %v657 = vmax.f32 %v655, %v656
        %v658 = vsel %vm636, %v547, -inf
        %v659 = vrot.slane %v658, 4
        %v660 = vmax.f32 %v658, %v659
        %v661 = vrot.slane %v660, 2
        %v662 = vmax.f32 %v660, %v661
        %v663 = vrot.slane %v662, 1
        %v664 = vmax.f32 %v662, %v663
        %v665 = vsel %vm636, %v555, -inf
        %v666 = vrot.slane %v665, 4
        %v667 = vmax.f32 %v665, %v666
        %v668 = vrot.slane %v667, 2
        %v669 = vmax.f32 %v667, %v668
        %v670 = vrot.slane %v669, 1
        %v671 = vmax.f32 %v669, %v670
        %v672 = vsel %vm636, %v563, -inf
        %v673 = vrot.slane %v672, 4
        %v674 = vmax.f32 %v672, %v673
        %v675 = vrot.slane %v674, 2
        %v676 = vmax.f32 %v674, %v675
        %v677 = vrot.slane %v676, 1
        %v678 = vmax.f32 %v676, %v677
        %v679 = vsel %vm636, %v562, -inf
        %v680 = vrot.slane %v679, 4
        %v681 = vmax.f32 %v679, %v680
        %v682 = vrot.slane %v681, 2
        %v683 = vmax.f32 %v681, %v682
        %v684 = vrot.slane %v683, 1
        %v685 = vmax.f32 %v683, %v684
        %v686 = vsel %vm636, %v564, -inf
        %v687 = vrot.slane %v686, 4
        %v688 = vmax.f32 %v686, %v687
        %v689 = vrot.slane %v688, 2
        %v690 = vmax.f32 %v688, %v689
        %v691 = vrot.slane %v690, 1
        %v692 = vmax.f32 %v690, %v691
        %v693 = vsel %vm636, %v572, -inf
        %v694 = vrot.slane %v693, 4
        %v695 = vmax.f32 %v693, %v694
        %v696 = vrot.slane %v695, 2
        %v697 = vmax.f32 %v695, %v696
        %v698 = vrot.slane %v697, 1
        %v699 = vmax.f32 %v697, %v698
        %v700 = vsel %vm636, %v580, -inf
        %v701 = vrot.slane %v700, 4
        %v702 = vmax.f32 %v700, %v701
        %v703 = vrot.slane %v702, 2
        %v704 = vmax.f32 %v702, %v703
        %v705 = vrot.slane %v704, 1
        %v706 = vmax.f32 %v704, %v705
        %v707 = vsel %vm636, %v579, -inf
        %v708 = vrot.slane %v707, 4
        %v709 = vmax.f32 %v707, %v708
        %v710 = vrot.slane %v709, 2
        %v711 = vmax.f32 %v709, %v710
        %v712 = vrot.slane %v711, 1
        %v713 = vmax.f32 %v711, %v712
        %v714 = vsel %vm636, %v581, -inf
        %v715 = vrot.slane %v714, 4
        %v716 = vmax.f32 %v714, %v715
        %v717 = vrot.slane %v716, 2
        %v718 = vmax.f32 %v716, %v717
        %v719 = vrot.slane %v718, 1
        %v720 = vmax.f32 %v718, %v719
        %v721 = vsel %vm636, %v589, -inf
        %v722 = vrot.slane %v721, 4
        %v723 = vmax.f32 %v721, %v722
        %v724 = vrot.slane %v723, 2
        %v725 = vmax.f32 %v723, %v724
        %v726 = vrot.slane %v725, 1
        %v727 = vmax.f32 %v725, %v726
        %v728 = vsel %vm636, %v597, -inf
        %v729 = vrot.slane %v728, 4
        %v730 = vmax.f32 %v728, %v729
        %v731 = vrot.slane %v730, 2
        %v732 = vmax.f32 %v730, %v731
        %v733 = vrot.slane %v732, 1
        %v734 = vmax.f32 %v732, %v733
        %v735 = vsel %vm636, %v596, -inf
        %v736 = vrot.slane %v735, 4
        %v737 = vmax.f32 %v735, %v736
        %v738 = vrot.slane %v737, 2
        %v739 = vmax.f32 %v737, %v738
        %v740 = vrot.slane %v739, 1
        %v741 = vmax.f32 %v739, %v740
        %v742 = vsel %vm636, %v598, -inf
        %v743 = vrot.slane %v742, 4
        %v744 = vmax.f32 %v742, %v743
        %v745 = vrot.slane %v744, 2
        %v746 = vmax.f32 %v744, %v745
        %v747 = vrot.slane %v746, 1
        %v748 = vmax.f32 %v746, %v747
        %v749 = vsel %vm636, %v606, -inf
        %v750 = vrot.slane %v749, 4
        %v751 = vmax.f32 %v749, %v750
        %v752 = vrot.slane %v751, 2
        %v753 = vmax.f32 %v751, %v752
        %v754 = vrot.slane %v753, 1
        %v755 = vmax.f32 %v753, %v754
        %v756 = vsel %vm636, %v614, -inf
        %v757 = vrot.slane %v756, 4
        %v758 = vmax.f32 %v756, %v757
        %v759 = vrot.slane %v758, 2
        %v760 = vmax.f32 %v758, %v759
        %v761 = vrot.slane %v760, 1
        %v762 = vmax.f32 %v760, %v761
        %v763 = vsel %vm636, %v613, -inf
        %v764 = vrot.slane %v763, 4
        %v765 = vmax.f32 %v763, %v764
        %v766 = vrot.slane %v765, 2
        %v767 = vmax.f32 %v765, %v766
        %v768 = vrot.slane %v767, 1
        %v769 = vmax.f32 %v767, %v768
        %v770 = vsel %vm636, %v615, -inf
        %v771 = vrot.slane %v770, 4
        %v772 = vmax.f32 %v770, %v771
        %v773 = vrot.slane %v772, 2
        %v774 = vmax.f32 %v772, %v773
        %v775 = vrot.slane %v774, 1
        %v776 = vmax.f32 %v774, %v775
        %v777 = vmax.f32 %v643, %v671
        %v778 = vmax.f32 %v650, %v678
        %v779 = vmax.f32 %v657, %v685
        %v780 = vmax.f32 %v664, %v692
        %v781 = vmax.f32 %v671, %v699
        %v782 = vmax.f32 %v678, %v706
        %v783 = vmax.f32 %v685, %v713
        %v784 = vmax.f32 %v692, %v720
        %v785 = vmax.f32 %v699, %v727
        %v786 = vmax.f32 %v706, %v734
        %v787 = vmax.f32 %v713, %v741
        %v788 = vmax.f32 %v720, %v748
        %v789 = vmax.f32 %v727, %v755
        %v790 = vmax.f32 %v734, %v762
        %v791 = vmax.f32 %v741, %v769
        %v792 = vmax.f32 %v748, %v776
        %vm809 = vcmask 1041409
        %v810 = vsel %vm809, %v778, %v777
        %vm811 = vcmask 1042434
        %v812 = vsel %vm811, %v779, %v810
        %vm813 = vcmask 1043459
        %v814 = vsel %vm813, %v780, %v812
        %v815 = vsel %vm809, %v782, %v781
        %v816 = vsel %vm811, %v783, %v815
        %v817 = vsel %vm813, %v784, %v816
        %v818 = vsel %vm809, %v786, %v785
        %v819 = vsel %vm811, %v787, %v818
        %v820 = vsel %vm813, %v788, %v819
        %v821 = vsel %vm809, %v790, %v789
        %v822 = vsel %vm811, %v791, %v821
        %v823 = vsel %vm813, %v792, %v822
        %v826 = vunpack.c.l.s4 1983009808
        %v827 = vunpack.c.0.s8 %v826
        %v828 = vlaneseq
        %v829 = vshrl.u32 %v828, 7
        %v830 = vsub.s32 %v827, %v829
        %v831 = vrot.slane %v814, %v830
        %v834 = vunpack.c.l.s4 1983009808
        %v835 = vunpack.c.0.s8 %v834
        %v836 = vlaneseq
        %v837 = vshrl.u32 %v836, 7
        %v838 = vsub.s32 %v835, %v837
        %v839 = vrot.slane %v817, %v838
        %v840 = vcombine.low %v831, %v839
        %v841 = vcombine.high %v831, %v839
        %v843 = vunpack.c.l.s4 1934713408
        %v844 = vunpack.c.0.s8 %v843
        %v845 = vlaneseq
        %v846 = vshrl.u32 %v845, 7
        %v847 = vsub.s32 %v844, %v846
        %v848 = vrot.slane %v840, %v847
        %v850 = vunpack.c.l.s4 1934713408
        %v851 = vunpack.c.0.s8 %v850
        %v852 = vlaneseq
        %v853 = vshrl.u32 %v852, 7
        %v854 = vsub.s32 %v851, %v853
        %v855 = vrot.slane %v841, %v854
        %v856 = vcombine.high %v848, 0.0
        %v857 = vcombine.high %v855, 0.0
        %v860 = vunpack.c.l.s4 1983009808
        %v861 = vunpack.c.0.s8 %v860
        %v862 = vlaneseq
        %v863 = vshrl.u32 %v862, 7
        %v864 = vsub.s32 %v861, %v863
        %v865 = vrot.slane %v820, %v864
        %v868 = vunpack.c.l.s4 1983009808
        %v869 = vunpack.c.0.s8 %v868
        %v870 = vlaneseq
        %v871 = vshrl.u32 %v870, 7
        %v872 = vsub.s32 %v869, %v871
        %v873 = vrot.slane %v823, %v872
        %v874 = vcombine.low %v865, %v873
        %v875 = vcombine.high %v865, %v873
        %v877 = vunpack.c.l.s4 1934713408
        %v878 = vunpack.c.0.s8 %v877
        %v879 = vlaneseq
        %v880 = vshrl.u32 %v879, 7
        %v881 = vsub.s32 %v878, %v880
        %v882 = vrot.slane %v874, %v881
        %v884 = vunpack.c.l.s4 1934713408
        %v885 = vunpack.c.0.s8 %v884
        %v886 = vlaneseq
        %v887 = vshrl.u32 %v886, 7
        %v888 = vsub.s32 %v885, %v887
        %v889 = vrot.slane %v875, %v888
        %v890 = vcombine.high %v882, 0.0
        %v891 = vcombine.high %v889, 0.0
        %894 = vrot.lane.b32.xlu0 %v856, 32
        %v895 = vpop.permute.xlu0 %894
        %896 = vrot.lane.b32.xlu0 %v890, 32
        %v897 = vpop.permute.xlu0 %896
        %902 = vrot.lane.b32.xlu0 %v855, 64
        %v903 = vpop.permute.xlu0 %902
        %904 = vrot.lane.b32.xlu0 %v889, 64
        %v905 = vpop.permute.xlu0 %904
        %910 = vrot.lane.b32.xlu0 %v857, 96
        %v911 = vpop.permute.xlu0 %910
        %912 = vrot.lane.b32.xlu0 %v891, 96
        %v913 = vpop.permute.xlu0 %912
        %vm916 = vcmask 261120
        %v917 = vsel %vm916, %v848, %v895
        %v918 = vsel %vm916, %v882, %v897
        %vm919 = vcmask 523264
        %v920 = vsel %vm919, %v917, %v903
        %v921 = vsel %vm919, %v918, %v905
        %vm922 = vcmask 785408
        %v923 = vsel %vm922, %v920, %v911
        %v924 = vsel %vm922, %v921, %v913
        %v925 = vsel %vm374, %v923, -inf
        %v926 = vrot.slane %v925, 4
        %v927 = vmax.f32 %v925, %v926
        %v928 = vrot.slane %v927, 2
        %v929 = vmax.f32 %v927, %v928
        %v930 = vrot.slane %v929, 1
        %v931 = vmax.f32 %v929, %v930
        %v932 = vsel %vm374, %v924, -inf
        %v933 = vrot.slane %v932, 4
        %v934 = vmax.f32 %v932, %v933
        %v935 = vrot.slane %v934, 2
        %v936 = vmax.f32 %v934, %v935
        %v937 = vrot.slane %v936, 1
        %v938 = vmax.f32 %v936, %v937
        %v941 = vsel %vm809, %v938, %v931
        %943 = vst [vmem:[%s233] sm:$0x3] %v941
        %s944 = sand.u32 %s134, 1
        %s945 = scalar_lea.sflag [#allocation4], %s944
        %s946 = sand.u32 %s134, 1
        %s947 = smul.addr %s946, 2
        %s948 = scalar_lea.vmem [#allocation5], %s947
        // Predicated region
        $region41: #{tpu_custom_call.1} parent=35 // pred_check
          %p949 = pneg %p144
        $region42: #{tpu_custom_call.1} parent=35 // pred_check_branch
          %951 = sbr.rel (%p949) target = $region44
        $region43: #{tpu_custom_call.1} parent=35 // pred_region
          %s953 = ssub.s32 32, 32
          %954 = vsyncadd %s945, %s953
          %s955 = smul.addr %s25, 2
          %s956 = sadd.s32 %s26, %s955
          %s957 = smul.addr %s956, 32
          %s958 = scalar_lea.hbm %s4, %s957
          %s960 = sshll.u32 %s948, 4
          %s961 = int_to_ptr.vmem [resolvable:$true] %s960
          %963 = dma.vmem_to_hbm [thread:$0]  %s961, 32, %s958, %s945
        $region44: #{tpu_custom_call.1} parent=35 // pred_fallthru
          _
      $region36: #{tpu_custom_call.1} parent=5 // pred_fallthru
        _
      %p964 = scmp.le.s32.totalorder 2, %s16
      // Predicated region
      $region45: #{tpu_custom_call.1} parent=5 // pred_check
        %p965 = pneg %p964
      $region46: #{tpu_custom_call.1} parent=5 // pred_check_branch
        %967 = sbr.rel (%p965) target = $region48
      $region47: #{tpu_custom_call.1} parent=5 // pred_region
        %s968 = ssub.s32 %s16, 2
        // Predicated region
        $region49: #{tpu_custom_call.1} parent=47 // pred_check
          %p969 = pneg %p150
        $region50: #{tpu_custom_call.1} parent=47 // pred_check_branch
          %971 = sbr.rel (%p969) target = $region52
        $region51: #{tpu_custom_call.1} parent=47 // pred_region
          %s972 = sand.u32 %s135, 1
          %s973 = scalar_lea.sflag [#allocation4], %s972
          %s974 = sand.u32 %s135, 1
          %s975 = smul.addr %s974, 2
          %s976 = scalar_lea.vmem [#allocation5], %s975
          %977 = dma.done %s973, 32
        $region52: #{tpu_custom_call.1} parent=47 // pred_fallthru
          _
      $region48: #{tpu_custom_call.1} parent=5 // pred_fallthru
        _
    $region6: #{tpu_custom_call.1} parent=1 // loop_footer
      %s20 = sadd.s32 1, %s16
    $region7: #{tpu_custom_call.1} parent=1 // loop_footer_branch
      %15 = sbr.rel target = $region3
    $region8: #{tpu_custom_call.1} parent=1 // loop_exit
      _
    %978 = vsyncpa [#allocation3], 1
    %s979 = scalar_lea.sflag [#allocation3], 1
    %980 = vsyncpa %s979, 1
    %981 = vsyncpa [#allocation4], 1
    %s982 = scalar_lea.sflag [#allocation4], 1
    %983 = vsyncpa %s982, 1

</llo_original>
